<compile_context>
chip_gen: v6e
topology: v6e:2x2x1
jax: 0.10.0
libtpu: 0.0.40
codegen_flags: <defaults>
</compile_context>

<pallas_src>
import functools

import jax
import jax.numpy as jnp
from jax.experimental import pallas as pl
from jax.experimental.pallas import tpu as pltpu


def _round_up(x: int, m: int) -> int:
    return (x + m - 1) // m * m


def _cdiv(a: int, b: int) -> int:
    return -(-a // b)


# --------------------------------------------------------------------------- #
# Kernel
# --------------------------------------------------------------------------- #
def _qnetwork_kernel(x_ref, w1_ref, b1_ref, w2_ref, b2_ref, w3_ref, b3_ref,
                     o_ref, *, bf16_act: bool):
    """Fused forward: silu(x@W1+b1) -> silu(.@W2+b2) -> .@W3+b3.

    MXU matmuls run on bf16 operands with f32 accumulation; bias adds are f32.
    SiLU runs in bf16 on v6e/v7x (bf16_act=True) and f32 on v5e/older.
    """
    x = x_ref[...].astype(jnp.bfloat16)                      # in-kernel cast

    def silu_to_bf16(h_f32):
        if bf16_act:
            h = h_f32.astype(jnp.bfloat16)                   # bf16 VPU/EUP
            return h * jax.nn.sigmoid(h)
        return (h_f32 * jax.nn.sigmoid(h_f32)).astype(jnp.bfloat16)

    h1 = jnp.dot(x, w1_ref[...], preferred_element_type=jnp.float32)
    h1 = silu_to_bf16(h1 + b1_ref[...])

    h2 = jnp.dot(h1, w2_ref[...], preferred_element_type=jnp.float32)
    h2 = silu_to_bf16(h2 + b2_ref[...])

    out = jnp.dot(h2, w3_ref[...], preferred_element_type=jnp.float32)
    o_ref[...] = (out + b3_ref[...]).astype(o_ref.dtype)


# --------------------------------------------------------------------------- #
# Wrapper
# --------------------------------------------------------------------------- #
def _batch_tiling(B: int, num_cores: int):
    """Pick (TB, B_pad) so padding is <= 8*steps rows and the grid splits
    evenly across TensorCores on multi-TC chips."""
    b8 = _round_up(max(B, 1), 8)
    max_tile = 1024                              # ~4 MiB f32 intermediates
    steps = _cdiv(b8, max_tile)
    if num_cores > 1 and b8 >= 256 * num_cores:  # enough work to split
        steps = _round_up(max(steps, num_cores), num_cores)
    tb = _round_up(_cdiv(b8, steps), 8)
    return tb, tb * steps


def prepare_qnetwork_params(w1, b1, w2, b2, w3, b3):
    """One-time (off hot path) prep: pad fc4 to 128 output lanes, cast the
    weight matrices to bf16 for the MXU, keep biases f32 for the f32 adds."""
    A = w3.shape[1]
    AP = _round_up(max(A, 1), 128)
    w3p = jnp.pad(w3, ((0, 0), (0, AP - A))) if AP != A else w3
    b3p = jnp.pad(b3, ((0, 0), (0, AP - A))) if AP != A else b3
    return (w1.astype(jnp.bfloat16), b1.astype(jnp.float32),
            w2.astype(jnp.bfloat16), b2.astype(jnp.float32),
            w3p.astype(jnp.bfloat16), b3p.astype(jnp.float32))


def tpu_prefs():
    """Static per-process hardware prefs (bf16 activations, TC count)."""
    kind = jax.devices()[0].device_kind.lower()
    bf16_act = ("v6" in kind) or ("v7" in kind)        # bf16 VPU/EUP chips
    num_cores = 2 if ("v7" in kind or "v4" in kind) else 1
    return bf16_act, num_cores


@functools.partial(jax.jit, static_argnames=("bf16_act", "num_cores"))
def qnetwork_forward_padded(states, prepared, *, bf16_act=True, num_cores=1):
    """Hot-path forward. Returns the padded (B_pad, 128-lane) Q-value slab;
    consume the first A lanes downstream (e.g. argmax) to avoid an extra
    slice/copy on the latency-critical path."""
    w1b, b1, w2b, b2, w3b, b3p = prepared
    B, S = states.shape
    H = w1b.shape[1]
    AP = w3b.shape[1]

    TB, B_pad = _batch_tiling(B, num_cores)
    x = states
    if B_pad != B:
        x = jnp.pad(x, ((0, B_pad - B), (0, 0)))

    grid = (B_pad // TB,)
    return pl.pallas_call(
        functools.partial(_qnetwork_kernel, bf16_act=bf16_act),
        out_shape=jax.ShapeDtypeStruct((B_pad, AP), jnp.float32),
        grid=grid,
        in_specs=[
            pl.BlockSpec((TB, S), lambda i: (i, 0)),   # streamed activations
            pl.BlockSpec((S, H), lambda i: (0, 0)),    # W1 resident
            pl.BlockSpec((1, H), lambda i: (0, 0)),    # b1 resident
            pl.BlockSpec((H, H), lambda i: (0, 0)),    # W2 resident
            pl.BlockSpec((1, H), lambda i: (0, 0)),    # b2 resident
            pl.BlockSpec((H, AP), lambda i: (0, 0)),   # W3 (padded) resident
            pl.BlockSpec((1, AP), lambda i: (0, 0)),   # b3 (padded) resident
        ],
        out_specs=pl.BlockSpec((TB, AP), lambda i: (i, 0)),
        compiler_params=pltpu.CompilerParams(
            dimension_semantics=("parallel",)),
    )(x, w1b, b1, w2b, b2, w3b, b3p)


def qnetwork_forward(states, prepared, action_space_size,
                     *, bf16_act=True, num_cores=1):
    """Convenience entry point: slices the padded output back to (B, A).
    (For lowest latency, use qnetwork_forward_padded directly.)"""
    out = qnetwork_forward_padded(states, prepared,
                                  bf16_act=bf16_act, num_cores=num_cores)
    return out[:states.shape[0], :action_space_size]


# --------------------------------------------------------------------------- #
# Params init + f32 reference
# --------------------------------------------------------------------------- #
def init_qnetwork_params(key, state_space_size, action_space_size,
                         hidden_size=512):
    """Mirror QNetwork.weight_init: W ~ Normal(0, sqrt(2/(fan_in+fan_out)));
    biases keep the PyTorch nn.Linear default U(-1/sqrt(fan_in), 1/sqrt(fan_in))
    (weight_init does not touch biases). Stored as [fan_in, fan_out]."""
    def linear(key, fan_in, fan_out):
        kw, kb = jax.random.split(key)
        std = jnp.sqrt(2.0 / (fan_in + fan_out))
        w = std * jax.random.normal(kw, (fan_in, fan_out), dtype=jnp.float32)
        bound = 1.0 / jnp.sqrt(float(fan_in))
        b = jax.random.uniform(kb, (1, fan_out), minval=-bound, maxval=bound,
                               dtype=jnp.float32)
        return w, b

    k1, k2, k3 = jax.random.split(key, 3)
    w1, b1 = linear(k1, state_space_size, hidden_size)
    w2, b2 = linear(k2, hidden_size, hidden_size)
    w3, b3 = linear(k3, hidden_size, action_space_size)
    return w1, b1, w2, b2, w3, b3
    # TODO(synk): AdamW optimizer / save_weights / load_weights / init_hidden
    # from the PyTorch module are not part of the forward pass and are omitted.


def reference_forward(states, w1, b1, w2, b2, w3, b3):
    """Pure-JAX f32 reference for correctness checking."""
    h1 = jax.nn.silu(states @ w1 + b1)
    h2 = jax.nn.silu(h1 @ w2 + b2)
    return h2 @ w3 + b3


# --------------------------------------------------------------------------- #
# Demo / self-test
# --------------------------------------------------------------------------- #
if __name__ == "__main__":
    key = jax.random.PRNGKey(0)
    k_params, k_small, k_large = jax.random.split(key, 3)

    state_space_size = 16
    action_space_size = 8
    raw_params = init_qnetwork_params(k_params, state_space_size,
                                      action_space_size)
    prepared = prepare_qnetwork_params(*raw_params)       # one-time prep
    bf16_act, num_cores = tpu_prefs()

    # Small batch (typical RL inference shape).
    batch = 8
    states = jax.random.normal(k_small, (batch, state_space_size),
                               dtype=jnp.float32)
    out = jax.block_until_ready(
        qnetwork_forward(states, prepared, action_space_size,
                         bf16_act=bf16_act, num_cores=num_cores))
    ref = reference_forward(states, *raw_params)
    assert out.shape == (batch, action_space_size)
    assert jnp.allclose(out, ref, atol=5e-2, rtol=5e-2), \
        "mismatch vs reference (small batch)"

    # Larger, non-aligned batch: exercises the minimal-padding batch tiling
    # (300 -> 304 rows, not 512) and the pipelined grid.
    big_batch = 300
    states_big = jax.random.normal(k_large, (big_batch, state_space_size),
                                   dtype=jnp.float32)
    out_big = jax.block_until_ready(
        qnetwork_forward(states_big, prepared, action_space_size,
                         bf16_act=bf16_act, num_cores=num_cores))
    ref_big = reference_forward(states_big, *raw_params)
    assert out_big.shape == (big_batch, action_space_size)
    assert jnp.allclose(out_big, ref_big, atol=5e-2, rtol=5e-2), \
        "mismatch vs reference (large batch)"

    # Exercise the f32-SiLU (v5e) code path as well for coverage.
    out_f32act = jax.block_until_ready(
        qnetwork_forward(states_big, prepared, action_space_size,
                         bf16_act=False, num_cores=1))
    assert jnp.allclose(out_f32act, ref_big, atol=5e-2, rtol=5e-2), \
        "mismatch vs reference (f32-silu path)"

    print("KERNEL_OK")
</pallas_src>

<mosaic_0001>
module attributes {stable_mosaic.version = 11 : i64} {
  func.func @_qnetwork_kernel(%arg0: i32, %arg1: memref<8x16xf32, #tpu.memory_space<vmem>>, %arg2: memref<16x512xbf16, #tpu.memory_space<vmem>>, %arg3: memref<1x512xf32, #tpu.memory_space<vmem>>, %arg4: memref<512x512xbf16, #tpu.memory_space<vmem>>, %arg5: memref<1x512xf32, #tpu.memory_space<vmem>>, %arg6: memref<512x128xbf16, #tpu.memory_space<vmem>>, %arg7: memref<1x128xf32, #tpu.memory_space<vmem>>, %arg8: memref<8x128xf32, #tpu.memory_space<vmem>>) attributes {dimension_semantics = [#tpu.dimension_semantics<parallel>], iteration_bounds = array<i64: 1>, scalar_prefetch = 0 : i64, scratch_operands = 0 : i64, tpu.core_type = #tpu.core_type<tc>, window_params = [{transform_indices = @transform_0, window_bounds = array<i64: 8, 16>}, {pipeline_mode = #tpu.pipeline_mode<synchronous>, transform_indices = @transform_1, window_bounds = array<i64: 16, 512>}, {pipeline_mode = #tpu.pipeline_mode<synchronous>, transform_indices = @transform_2, window_bounds = array<i64: 1, 512>}, {pipeline_mode = #tpu.pipeline_mode<synchronous>, transform_indices = @transform_3, window_bounds = array<i64: 512, 512>}, {pipeline_mode = #tpu.pipeline_mode<synchronous>, transform_indices = @transform_4, window_bounds = array<i64: 1, 512>}, {pipeline_mode = #tpu.pipeline_mode<synchronous>, transform_indices = @transform_5, window_bounds = array<i64: 512, 128>}, {pipeline_mode = #tpu.pipeline_mode<synchronous>, transform_indices = @transform_6, window_bounds = array<i64: 1, 128>}, {transform_indices = @transform_7, window_bounds = array<i64: 8, 128>}]} {
    %c0 = arith.constant 0 : index
    %c0_0 = arith.constant 0 : index
    %0 = vector.load %arg1[%c0, %c0_0] : memref<8x16xf32, #tpu.memory_space<vmem>>, vector<8x16xf32>
    %1 = arith.truncf %0 : vector<8x16xf32> to vector<8x16xbf16>
    %c0_1 = arith.constant 0 : index
    %c0_2 = arith.constant 0 : index
    %2 = vector.load %arg2[%c0_1, %c0_2] : memref<16x512xbf16, #tpu.memory_space<vmem>>, vector<16x512xbf16>
    %cst = arith.constant dense<0.000000e+00> : vector<8x512xf32>
    %3 = tpu.matmul %1, %2, %cst {dimension_numbers = #tpu.dot_dimension_numbers<[1], [0], [0], [1], [0, 0, 1, 1], [], []>} : vector<8x16xbf16>, vector<16x512xbf16>, vector<8x512xf32> -> vector<8x512xf32>
    %c0_3 = arith.constant 0 : index
    %c0_4 = arith.constant 0 : index
    %4 = vector.load %arg3[%c0_3, %c0_4] : memref<1x512xf32, #tpu.memory_space<vmem>>, vector<1x512xf32>
    %5 = vector.broadcast %4 : vector<1x512xf32> to vector<8x512xf32>
    %6 = arith.addf %3, %5 : vector<8x512xf32>
    %7 = arith.negf %6 : vector<8x512xf32>
    %8 = math.exp %7 : vector<8x512xf32>
    %cst_5 = arith.constant 1.000000e+00 : f32
    %9 = vector.broadcast %cst_5 : f32 to vector<8x512xf32>
    %10 = arith.addf %9, %8 : vector<8x512xf32>
    %11 = arith.divf %9, %10 : vector<8x512xf32>
    %12 = arith.mulf %6, %11 : vector<8x512xf32>
    %13 = arith.truncf %12 : vector<8x512xf32> to vector<8x512xbf16>
    %c0_6 = arith.constant 0 : index
    %c0_7 = arith.constant 0 : index
    %14 = vector.load %arg4[%c0_6, %c0_7] : memref<512x512xbf16, #tpu.memory_space<vmem>>, vector<512x512xbf16>
    %cst_8 = arith.constant dense<0.000000e+00> : vector<8x512xf32>
    %15 = tpu.matmul %13, %14, %cst_8 {dimension_numbers = #tpu.dot_dimension_numbers<[1], [0], [0], [1], [0, 0, 1, 1], [], []>} : vector<8x512xbf16>, vector<512x512xbf16>, vector<8x512xf32> -> vector<8x512xf32>
    %c0_9 = arith.constant 0 : index
    %c0_10 = arith.constant 0 : index
    %16 = vector.load %arg5[%c0_9, %c0_10] : memref<1x512xf32, #tpu.memory_space<vmem>>, vector<1x512xf32>
    %17 = vector.broadcast %16 : vector<1x512xf32> to vector<8x512xf32>
    %18 = arith.addf %15, %17 : vector<8x512xf32>
    %19 = arith.negf %18 : vector<8x512xf32>
    %20 = math.exp %19 : vector<8x512xf32>
    %cst_11 = arith.constant 1.000000e+00 : f32
    %21 = vector.broadcast %cst_11 : f32 to vector<8x512xf32>
    %22 = arith.addf %21, %20 : vector<8x512xf32>
    %23 = arith.divf %21, %22 : vector<8x512xf32>
    %24 = arith.mulf %18, %23 : vector<8x512xf32>
    %25 = arith.truncf %24 : vector<8x512xf32> to vector<8x512xbf16>
    %c0_12 = arith.constant 0 : index
    %c0_13 = arith.constant 0 : index
    %26 = vector.load %arg6[%c0_12, %c0_13] : memref<512x128xbf16, #tpu.memory_space<vmem>>, vector<512x128xbf16>
    %cst_14 = arith.constant dense<0.000000e+00> : vector<8x128xf32>
    %27 = tpu.matmul %25, %26, %cst_14 {dimension_numbers = #tpu.dot_dimension_numbers<[1], [0], [0], [1], [0, 0, 1, 1], [], []>} : vector<8x512xbf16>, vector<512x128xbf16>, vector<8x128xf32> -> vector<8x128xf32>
    %c0_15 = arith.constant 0 : index
    %c0_16 = arith.constant 0 : index
    %28 = vector.load %arg7[%c0_15, %c0_16] : memref<1x128xf32, #tpu.memory_space<vmem>>, vector<1x128xf32>
    %29 = vector.broadcast %28 : vector<1x128xf32> to vector<8x128xf32>
    %30 = arith.addf %27, %29 : vector<8x128xf32>
    %c0_17 = arith.constant 0 : index
    %c0_18 = arith.constant 0 : index
    %31 = vector.load %arg8[%c0_17, %c0_18] : memref<8x128xf32, #tpu.memory_space<vmem>>, vector<8x128xf32>
    tpu.vector_store %arg8[%c0_17, %c0_18], %30 {strides = array<i32>} : memref<8x128xf32, #tpu.memory_space<vmem>>, vector<8x128xf32>,
    return
  }
  func.func @transform_0(%arg0: i32) -> (i32, i32) {
    %c0_i32 = arith.constant 0 : i32
    %c0_i32_0 = arith.constant 0 : i32
    return %arg0, %c0_i32 : i32, i32
  }
  func.func @transform_1(%arg0: i32) -> (i32, i32) {
    %c0_i32 = arith.constant 0 : i32
    %c0_i32_0 = arith.constant 0 : i32
    %c0_i32_1 = arith.constant 0 : i32
    return %c0_i32, %c0_i32_0 : i32, i32
  }
  func.func @transform_2(%arg0: i32) -> (i32, i32) {
    %c0_i32 = arith.constant 0 : i32
    %c0_i32_0 = arith.constant 0 : i32
    %c0_i32_1 = arith.constant 0 : i32
    return %c0_i32, %c0_i32_0 : i32, i32
  }
  func.func @transform_3(%arg0: i32) -> (i32, i32) {
    %c0_i32 = arith.constant 0 : i32
    %c0_i32_0 = arith.constant 0 : i32
    %c0_i32_1 = arith.constant 0 : i32
    return %c0_i32, %c0_i32_0 : i32, i32
  }
  func.func @transform_4(%arg0: i32) -> (i32, i32) {
    %c0_i32 = arith.constant 0 : i32
    %c0_i32_0 = arith.constant 0 : i32
    %c0_i32_1 = arith.constant 0 : i32
    return %c0_i32, %c0_i32_0 : i32, i32
  }
  func.func @transform_5(%arg0: i32) -> (i32, i32) {
    %c0_i32 = arith.constant 0 : i32
    %c0_i32_0 = arith.constant 0 : i32
    %c0_i32_1 = arith.constant 0 : i32
    return %c0_i32, %c0_i32_0 : i32, i32
  }
  func.func @transform_6(%arg0: i32) -> (i32, i32) {
    %c0_i32 = arith.constant 0 : i32
    %c0_i32_0 = arith.constant 0 : i32
    %c0_i32_1 = arith.constant 0 : i32
    return %c0_i32, %c0_i32_0 : i32, i32
  }
  func.func @transform_7(%arg0: i32) -> (i32, i32) {
    %c0_i32 = arith.constant 0 : i32
    %c0_i32_0 = arith.constant 0 : i32
    return %arg0, %c0_i32 : i32, i32
  }
}

</mosaic_0001>

<llo_original>
// kernel: qnetwork_forward_padded.1
$region0: #{qnetwork_forward_padded.1}
  #allocation0 [shape = 'u32[]', space=smem, size = 0x4, offset = 0x4, fixed_abs, tag = 'smem constant byte address 0x4 - core index']
  #allocation1 [shape = 'u32[144,128]{1,0:T(1,128)}', space=vmem, size = 0x12000, scoped, tag = 'internal scratch']
  %s0 = inlined_call_operand.hbm [shape: f32[8,16], index: 0, kind: input, shape index: {}]
  %s1 = inlined_call_operand.hbm [shape: bf16[16,512], index: 1, kind: input, shape index: {}]
  %s2 = inlined_call_operand.hbm [shape: f32[1,512], index: 2, kind: input, shape index: {}]
  %s3 = inlined_call_operand.hbm [shape: bf16[512,512], index: 3, kind: input, shape index: {}]
  %s4 = inlined_call_operand.vmem [shape: f32[1,512], index: 4, kind: input, shape index: {}]
  %s5 = inlined_call_operand.hbm [shape: bf16[512,128], index: 5, kind: input, shape index: {}]
  %s6 = inlined_call_operand.vmem [shape: f32[1,128], index: 6, kind: input, shape index: {}]
  %s7 = inlined_call_operand.hbm [shape: f32[8,128], index: 7, kind: output, shape index: {}]
  %s8 = sld [smem:[#allocation0]]
  $region58: #{qnetwork_forward_padded.1} parent=0
    _
  %s10 = ssub.s32 1, %s8
  %s11 = scalar_select 0, %s10, %s8
  $region1: #{qnetwork_forward_padded.1} parent=0
    #allocation2 [shape = 'u8[4096]{0}', space=vmem, size = 0x1000, scoped, tag = 'input window, operand 0, single buffered']
    #allocation3 [shape = 's32[1]{0}', space=sflag, size = 0x4, scoped, tag = 'scoped memory for qnetwork_forward_padded.1']
    #allocation4 [shape = 's32[1]{0}', space=sflag, size = 0x4, scoped, tag = 'scoped memory for qnetwork_forward_padded.1']
    #allocation5 [shape = 'u8[16384]{0}', space=vmem, size = 0x4000, scoped, tag = 'input window, operand 1, single buffered']
    #allocation6 [shape = 's32[1]{0}', space=sflag, size = 0x4, scoped, tag = 'scoped memory for qnetwork_forward_padded.1']
    #allocation7 [shape = 'u8[2048]{0}', space=vmem, size = 0x800, scoped, tag = 'input window, operand 2, single buffered']
    #allocation8 [shape = 'u8[524288]{0}', space=vmem, size = 0x80000, scoped, tag = 'input window, operand 3, single buffered']
    #allocation9 [shape = 's32[1]{0}', space=sflag, size = 0x4, scoped, tag = 'scoped memory for qnetwork_forward_padded.1']
    #allocation10 [shape = 'u8[131072]{0}', space=vmem, size = 0x20000, scoped, tag = 'input window, operand 5, single buffered']
    #allocation11 [shape = 'u8[4096]{0}', space=vmem, size = 0x1000, scoped, tag = 'output window, operand 0, single buffered']
    %12 = vsyncpa [#allocation3], 0
    %13 = vsyncpa [#allocation6], 0
    %14 = vsyncpa [#allocation9], 0
    %15 = vsyncpa [#allocation4], 0
    // Predicated region
    $region2: #{qnetwork_forward_padded.1} parent=1 // pred_check
      _
    $region3: #{qnetwork_forward_padded.1} parent=1 // pred_check_branch
      %17 = sbr.rel (0) target = $region5
    $region4: #{qnetwork_forward_padded.1} parent=1 // pred_region
      %s19 = ssub.s32 128, 128
      %20 = vsyncadd [#allocation3], %s19
      %s22 = sshll.u32 [#allocation2], 4
      %s23 = int_to_ptr.vmem [resolvable:$true] %s22
      %25 = dma.hbm_to_vmem [thread:$0]  %s0, 128, %s23, [#allocation3]
    $region5: #{qnetwork_forward_padded.1} parent=1 // pred_fallthru
      _
    // Predicated region
    $region6: #{qnetwork_forward_padded.1} parent=1 // pred_check
      _
    $region7: #{qnetwork_forward_padded.1} parent=1 // pred_check_branch
      %27 = sbr.rel (0) target = $region9
    $region8: #{qnetwork_forward_padded.1} parent=1 // pred_region
      %s29 = ssub.s32 512, 512
      %30 = vsyncadd [#allocation6], %s29
      %s31 = sshll.u32 [#allocation5], 4
      %s32 = int_to_ptr.vmem [resolvable:$true] %s31
      %37 = dma.hbm_to_vmem [thread:$0]  %s1, 512, %s32, [#allocation6], 256, 256, 16
    $region9: #{qnetwork_forward_padded.1} parent=1 // pred_fallthru
      _
    // Predicated region
    $region10: #{qnetwork_forward_padded.1} parent=1 // pred_check
      _
    $region11: #{qnetwork_forward_padded.1} parent=1 // pred_check_branch
      %39 = sbr.rel (0) target = $region13
    $region12: #{qnetwork_forward_padded.1} parent=1 // pred_region
      %s41 = ssub.s32 64, 64
      %42 = vsyncadd [#allocation6], %s41
      %s44 = sshll.u32 [#allocation7], 4
      %s45 = int_to_ptr.vmem [resolvable:$true] %s44
      %47 = dma.hbm_to_vmem [thread:$0]  %s2, 64, %s45, [#allocation6]
    $region13: #{qnetwork_forward_padded.1} parent=1 // pred_fallthru
      _
    // Predicated region
    $region14: #{qnetwork_forward_padded.1} parent=1 // pred_check
      _
    $region15: #{qnetwork_forward_padded.1} parent=1 // pred_check_branch
      %49 = sbr.rel (0) target = $region17
    $region16: #{qnetwork_forward_padded.1} parent=1 // pred_region
      %s51 = ssub.s32 16384, 16384
      %52 = vsyncadd [#allocation9], %s51
      %s53 = sshll.u32 [#allocation8], 4
      %s54 = int_to_ptr.vmem [resolvable:$true] %s53
      %59 = dma.hbm_to_vmem [thread:$0]  %s3, 16384, %s54, [#allocation9], 256, 256, 16
    $region17: #{qnetwork_forward_padded.1} parent=1 // pred_fallthru
      _
    // Predicated region
    $region18: #{qnetwork_forward_padded.1} parent=1 // pred_check
      _
    $region19: #{qnetwork_forward_padded.1} parent=1 // pred_check_branch
      %61 = sbr.rel (0) target = $region21
    $region20: #{qnetwork_forward_padded.1} parent=1 // pred_region
      _
    $region21: #{qnetwork_forward_padded.1} parent=1 // pred_fallthru
      _
    // Predicated region
    $region22: #{qnetwork_forward_padded.1} parent=1 // pred_check
      _
    $region23: #{qnetwork_forward_padded.1} parent=1 // pred_check_branch
      %63 = sbr.rel (0) target = $region25
    $region24: #{qnetwork_forward_padded.1} parent=1 // pred_region
      %s65 = ssub.s32 4096, 4096
      %66 = vsyncadd [#allocation9], %s65
      %s67 = sshll.u32 [#allocation10], 4
      %s68 = int_to_ptr.vmem [resolvable:$true] %s67
      %73 = dma.hbm_to_vmem [thread:$0]  %s5, 4096, %s68, [#allocation9], 64, 64, 4
    $region25: #{qnetwork_forward_padded.1} parent=1 // pred_fallthru
      _
    // Predicated region
    $region26: #{qnetwork_forward_padded.1} parent=1 // pred_check
      _
    $region27: #{qnetwork_forward_padded.1} parent=1 // pred_check_branch
      %75 = sbr.rel (0) target = $region29
    $region28: #{qnetwork_forward_padded.1} parent=1 // pred_region
      _
    $region29: #{qnetwork_forward_padded.1} parent=1 // pred_fallthru
      _
    // Predicated region
    $region30: #{qnetwork_forward_padded.1} parent=1 // pred_check
      _
    $region31: #{qnetwork_forward_padded.1} parent=1 // pred_check_branch
      %77 = sbr.rel (0) target = $region33
    $region32: #{qnetwork_forward_padded.1} parent=1 // pred_region
      %78 = dma.done [#allocation3], 128
    $region33: #{qnetwork_forward_padded.1} parent=1 // pred_fallthru
      _
    // Predicated region
    $region34: #{qnetwork_forward_padded.1} parent=1 // pred_check
      _
    $region35: #{qnetwork_forward_padded.1} parent=1 // pred_check_branch
      %80 = sbr.rel (0) target = $region37
    $region36: #{qnetwork_forward_padded.1} parent=1 // pred_region
      %81 = dma.done [#allocation6], 512
    $region37: #{qnetwork_forward_padded.1} parent=1 // pred_fallthru
      _
    // Predicated region
    $region38: #{qnetwork_forward_padded.1} parent=1 // pred_check
      _
    $region39: #{qnetwork_forward_padded.1} parent=1 // pred_check_branch
      %83 = sbr.rel (0) target = $region41
    $region40: #{qnetwork_forward_padded.1} parent=1 // pred_region
      %84 = dma.done [#allocation6], 64
    $region41: #{qnetwork_forward_padded.1} parent=1 // pred_fallthru
      _
    // Predicated region
    $region42: #{qnetwork_forward_padded.1} parent=1 // pred_check
      _
    $region43: #{qnetwork_forward_padded.1} parent=1 // pred_check_branch
      %86 = sbr.rel (0) target = $region45
    $region44: #{qnetwork_forward_padded.1} parent=1 // pred_region
      %87 = dma.done [#allocation9], 16384
    $region45: #{qnetwork_forward_padded.1} parent=1 // pred_fallthru
      _
    // Predicated region
    $region46: #{qnetwork_forward_padded.1} parent=1 // pred_check
      _
    $region47: #{qnetwork_forward_padded.1} parent=1 // pred_check_branch
      %89 = sbr.rel (0) target = $region49
    $region48: #{qnetwork_forward_padded.1} parent=1 // pred_region
      %90 = dma.done [#allocation9], 4096
    $region49: #{qnetwork_forward_padded.1} parent=1 // pred_fallthru
      _
    %v92 = vld [vmem:[#allocation2] sm:$0xff]
    %v93 = vpack.c.bf16 %v92, %v92
    %v94 = vld [vmem:[#allocation5] sm:$0xff]
    %v95 = vld [vmem:[#allocation5 + $0x8] sm:$0xff]
    %v96 = vld [vmem:[#allocation5 + $0x10] sm:$0xff]
    %v97 = vld [vmem:[#allocation5 + $0x18] sm:$0xff]
    %v98 = vld [vmem:[#allocation7] sm:$0xf]
    %v100 = vlaneseq
    %v101 = vshrl.u32 %v100, 7
    %v102 = vsub.s32 0, %v101
    %v103 = vrot.slane %v98, %v102
    %v104 = vlaneseq
    %v105 = vshrl.u32 %v104, 7
    %v106 = vsub.s32 1, %v105
    %v107 = vrot.slane %v98, %v106
    %v108 = vlaneseq
    %v109 = vshrl.u32 %v108, 7
    %v110 = vsub.s32 2, %v109
    %v111 = vrot.slane %v98, %v110
    %v112 = vlaneseq
    %v113 = vshrl.u32 %v112, 7
    %v114 = vsub.s32 3, %v113
    %v115 = vrot.slane %v98, %v114
    %v124 = vunpack.c.l.b16 %v94
    %v125 = vunpack.c.h.b16 %v94
    %v126 = vunpack.c.l.b16 %v95
    %v127 = vunpack.c.h.b16 %v95
    %v128 = vunpack.c.l.b16 %v96
    %v129 = vunpack.c.h.b16 %v96
    %v130 = vunpack.c.l.b16 %v97
    %v131 = vunpack.c.h.b16 %v97
    %v132 = vpack.c.b16 %v128, %v124
    %v133 = vpack.c.b16 %v129, %v125
    %v134 = vpack.c.b16 %v130, %v126
    %v135 = vpack.c.b16 %v131, %v127
    %vm140 = vcmask 130048
    %v142 = vsel %vm140, %v93, 0
    %144 = vmatprep.subr.bf16.mxu0 0
    %145 = vmatpush1.bf16.msra.mxu0 0
    %146 = vmatprep.subr.bf16.mxu0 0
    %147 = vmatpush1.bf16.msra.mxu0 0
    %148 = vmatprep.subr.bf16.mxu0 0
    %149 = vmatpush1.bf16.msra.mxu0 0
    %150 = vmatprep.subr.bf16.mxu0 0
    %151 = vmatpush1.bf16.msra.mxu0 0
    %152 = vmatprep.subr.bf16.mxu0 0
    %153 = vmatpush1.bf16.msra.mxu0 0
    %154 = vmatprep.subr.bf16.mxu0 0
    %155 = vmatpush1.bf16.msra.mxu0 0
    %156 = vmatprep.subr.bf16.mxu0 0
    %157 = vmatpush1.bf16.msra.mxu0 0
    %158 = vmatprep.subr.bf16.mxu0 %v133
    %159 = vmatpush1.bf16.msra.mxu0 %v132
    %160 = vmatprep.subr.bf16.mxu0 0
    %161 = vmatpush2.bf16.msra.mxu0 0
    %162 = vmatprep.subr.bf16.mxu0 0
    %163 = vmatpush2.bf16.msra.mxu0 0
    %164 = vmatprep.subr.bf16.mxu0 0
    %165 = vmatpush2.bf16.msra.mxu0 0
    %166 = vmatprep.subr.bf16.mxu0 0
    %167 = vmatpush2.bf16.msra.mxu0 0
    %168 = vmatprep.subr.bf16.mxu0 0
    %169 = vmatpush2.bf16.msra.mxu0 0
    %170 = vmatprep.subr.bf16.mxu0 0
    %171 = vmatpush2.bf16.msra.mxu0 0
    %172 = vmatprep.subr.bf16.mxu0 0
    %173 = vmatpush2.bf16.msra.mxu0 0
    %174 = vmatprep.subr.bf16.mxu0 0
    %175 = vmatpush2.bf16.msra.mxu0 0
    %176 = vmatprep.mubr.bf16.mxu0 0
    %177 = vmatmul.mubr.bf16.gmra.mxu0 %v142
    %v178 = vpop.f32.mrf.mxu0
    %v179 = vadd.f32 %v103, %v178
    %v180 = vpop.f32.mrf.mxu0
    %v181 = vadd.f32 %v107, %v180
    %v182 = vpop.f32.mrf.mxu0
    %v183 = vpop.f32.mrf.mxu0
    %184 = vdwg.mxu0
    %185 = vmatprep.subr.bf16.mxu0 0
    %186 = vmatpush1.bf16.msra.mxu0 0
    %187 = vmatprep.subr.bf16.mxu0 0
    %188 = vmatpush1.bf16.msra.mxu0 0
    %189 = vmatprep.subr.bf16.mxu0 0
    %190 = vmatpush1.bf16.msra.mxu0 0
    %191 = vmatprep.subr.bf16.mxu0 0
    %192 = vmatpush1.bf16.msra.mxu0 0
    %193 = vmatprep.subr.bf16.mxu0 0
    %194 = vmatpush1.bf16.msra.mxu0 0
    %195 = vmatprep.subr.bf16.mxu0 0
    %196 = vmatpush1.bf16.msra.mxu0 0
    %197 = vmatprep.subr.bf16.mxu0 0
    %198 = vmatpush1.bf16.msra.mxu0 0
    %199 = vmatprep.subr.bf16.mxu0 %v135
    %200 = vmatpush1.bf16.msra.mxu0 %v134
    %201 = vmatprep.subr.bf16.mxu0 0
    %202 = vmatpush2.bf16.msra.mxu0 0
    %203 = vmatprep.subr.bf16.mxu0 0
    %204 = vmatpush2.bf16.msra.mxu0 0
    %205 = vmatprep.subr.bf16.mxu0 0
    %206 = vmatpush2.bf16.msra.mxu0 0
    %207 = vmatprep.subr.bf16.mxu0 0
    %208 = vmatpush2.bf16.msra.mxu0 0
    %209 = vmatprep.subr.bf16.mxu0 0
    %210 = vmatpush2.bf16.msra.mxu0 0
    %211 = vmatprep.subr.bf16.mxu0 0
    %212 = vmatpush2.bf16.msra.mxu0 0
    %213 = vmatprep.subr.bf16.mxu0 0
    %214 = vmatpush2.bf16.msra.mxu0 0
    %215 = vmatprep.subr.bf16.mxu0 0
    %216 = vmatpush2.bf16.msra.mxu0 0
    %217 = vmatprep.mubr.bf16.mxu0 0
    %218 = vmatmul.mubr.bf16.gmra.mxu0 %v142
    %v219 = vpop.f32.mrf.mxu0
    %v220 = vadd.f32 %v111, %v219
    %v221 = vpop.f32.mrf.mxu0
    %v222 = vadd.f32 %v115, %v221
    %v223 = vpop.f32.mrf.mxu0
    %v224 = vpop.f32.mrf.mxu0
    %225 = vdwg.mxu0
    %v226 = vxor.u32 %v179, 2147483648
    %v227 = vxor.u32 %v181, 2147483648
    %v228 = vxor.u32 %v220, 2147483648
    %v229 = vxor.u32 %v222, 2147483648
    %v230 = vmul.f32 %v226, 1.442695
    %v231 = vpow.pop %v230
    %v232 = vmul.f32 %v227, 1.442695
    %v233 = vpow.pop %v232
    %v234 = vmul.f32 %v228, 1.442695
    %v235 = vpow.pop %v234
    %v236 = vmul.f32 %v229, 1.442695
    %v237 = vpow.pop %v236
    %v238 = vadd.f32 %v231, 1.0
    %v239 = vadd.f32 %v233, 1.0
    %v240 = vadd.f32 %v235, 1.0
    %v241 = vadd.f32 %v237, 1.0
    %v242 = vrcp.pop %v238
    %v243 = vmul.f32 1.0, %v242
    %v244 = vrcp.pop %v239
    %v245 = vmul.f32 1.0, %v244
    %v246 = vrcp.pop %v240
    %v247 = vmul.f32 1.0, %v246
    %v248 = vrcp.pop %v241
    %v249 = vmul.f32 1.0, %v248
    %v250 = vmul.f32 %v179, %v243
    %v251 = vmul.f32 %v181, %v245
    %v252 = vmul.f32 %v220, %v247
    %v253 = vmul.f32 %v222, %v249
    %v254 = vpack.c.bf16 %v250, %v250
    %v255 = vpack.c.bf16 %v251, %v251
    %v256 = vpack.c.bf16 %v252, %v252
    %v257 = vpack.c.bf16 %v253, %v253
    %v258 = vld [vmem:[#allocation8] sm:$0xff]
    %v259 = vld [vmem:[#allocation8 + $0x8] sm:$0xff]
    %v260 = vld [vmem:[#allocation8 + $0x10] sm:$0xff]
    %v261 = vld [vmem:[#allocation8 + $0x18] sm:$0xff]
    %v262 = vld [vmem:[#allocation8 + $0x20] sm:$0xff]
    %v263 = vld [vmem:[#allocation8 + $0x28] sm:$0xff]
    %v264 = vld [vmem:[#allocation8 + $0x30] sm:$0xff]
    %v265 = vld [vmem:[#allocation8 + $0x38] sm:$0xff]
    %v266 = vld [vmem:[#allocation8 + $0x40] sm:$0xff]
    %v267 = vld [vmem:[#allocation8 + $0x48] sm:$0xff]
    %v268 = vld [vmem:[#allocation8 + $0x50] sm:$0xff]
    %v269 = vld [vmem:[#allocation8 + $0x58] sm:$0xff]
    %v270 = vld [vmem:[#allocation8 + $0x60] sm:$0xff]
    %v271 = vld [vmem:[#allocation8 + $0x68] sm:$0xff]
    %v272 = vld [vmem:[#allocation8 + $0x70] sm:$0xff]
    %v273 = vld [vmem:[#allocation8 + $0x78] sm:$0xff]
    %v274 = vld [vmem:[#allocation8 + $0x80] sm:$0xff]
    %v275 = vld [vmem:[#allocation8 + $0x88] sm:$0xff]
    %v276 = vld [vmem:[#allocation8 + $0x90] sm:$0xff]
    %v277 = vld [vmem:[#allocation8 + $0x98] sm:$0xff]
    %v278 = vld [vmem:[#allocation8 + $0xa0] sm:$0xff]
    %v279 = vld [vmem:[#allocation8 + $0xa8] sm:$0xff]
    %v280 = vld [vmem:[#allocation8 + $0xb0] sm:$0xff]
    %v281 = vld [vmem:[#allocation8 + $0xb8] sm:$0xff]
    %v282 = vld [vmem:[#allocation8 + $0xc0] sm:$0xff]
    %v283 = vld [vmem:[#allocation8 + $0xc8] sm:$0xff]
    %v284 = vld [vmem:[#allocation8 + $0xd0] sm:$0xff]
    %v285 = vld [vmem:[#allocation8 + $0xd8] sm:$0xff]
    %v286 = vld [vmem:[#allocation8 + $0xe0] sm:$0xff]
    %v287 = vld [vmem:[#allocation8 + $0xe8] sm:$0xff]
    %v288 = vld [vmem:[#allocation8 + $0xf0] sm:$0xff]
    %v289 = vld [vmem:[#allocation8 + $0xf8] sm:$0xff]
    %v290 = vld [vmem:[#allocation8 + $0x100] sm:$0xff]
    %v291 = vld [vmem:[#allocation8 + $0x108] sm:$0xff]
    %v292 = vld [vmem:[#allocation8 + $0x110] sm:$0xff]
    %v293 = vld [vmem:[#allocation8 + $0x118] sm:$0xff]
    %v294 = vld [vmem:[#allocation8 + $0x120] sm:$0xff]
    %v295 = vld [vmem:[#allocation8 + $0x128] sm:$0xff]
    %v296 = vld [vmem:[#allocation8 + $0x130] sm:$0xff]
    %v297 = vld [vmem:[#allocation8 + $0x138] sm:$0xff]
    %v298 = vld [vmem:[#allocation8 + $0x140] sm:$0xff]
    %v299 = vld [vmem:[#allocation8 + $0x148] sm:$0xff]
    %v300 = vld [vmem:[#allocation8 + $0x150] sm:$0xff]
    %v301 = vld [vmem:[#allocation8 + $0x158] sm:$0xff]
    %v302 = vld [vmem:[#allocation8 + $0x160] sm:$0xff]
    %v303 = vld [vmem:[#allocation8 + $0x168] sm:$0xff]
    %v304 = vld [vmem:[#allocation8 + $0x170] sm:$0xff]
    %v305 = vld [vmem:[#allocation8 + $0x178] sm:$0xff]
    %v306 = vld [vmem:[#allocation8 + $0x180] sm:$0xff]
    %v307 = vld [vmem:[#allocation8 + $0x188] sm:$0xff]
    %v308 = vld [vmem:[#allocation8 + $0x190] sm:$0xff]
    %v309 = vld [vmem:[#allocation8 + $0x198] sm:$0xff]
    %v310 = vld [vmem:[#allocation8 + $0x1a0] sm:$0xff]
    %v311 = vld [vmem:[#allocation8 + $0x1a8] sm:$0xff]
    %v312 = vld [vmem:[#allocation8 + $0x1b0] sm:$0xff]
    %v313 = vld [vmem:[#allocation8 + $0x1b8] sm:$0xff]
    %v314 = vld [vmem:[#allocation8 + $0x1c0] sm:$0xff]
    %v315 = vld [vmem:[#allocation8 + $0x1c8] sm:$0xff]
    %v316 = vld [vmem:[#allocation8 + $0x1d0] sm:$0xff]
    %v317 = vld [vmem:[#allocation8 + $0x1d8] sm:$0xff]
    %v318 = vld [vmem:[#allocation8 + $0x1e0] sm:$0xff]
    %v319 = vld [vmem:[#allocation8 + $0x1e8] sm:$0xff]
    %v320 = vld [vmem:[#allocation8 + $0x1f0] sm:$0xff]
    %v321 = vld [vmem:[#allocation8 + $0x1f8] sm:$0xff]
    %v322 = vld [vmem:[#allocation8 + $0x200] sm:$0xff]
    %v323 = vld [vmem:[#allocation8 + $0x208] sm:$0xff]
    %v324 = vld [vmem:[#allocation8 + $0x210] sm:$0xff]
    %v325 = vld [vmem:[#allocation8 + $0x218] sm:$0xff]
    %v326 = vld [vmem:[#allocation8 + $0x220] sm:$0xff]
    %v327 = vld [vmem:[#allocation8 + $0x228] sm:$0xff]
    %v328 = vld [vmem:[#allocation8 + $0x230] sm:$0xff]
    %v329 = vld [vmem:[#allocation8 + $0x238] sm:$0xff]
    %v330 = vld [vmem:[#allocation8 + $0x240] sm:$0xff]
    %v331 = vld [vmem:[#allocation8 + $0x248] sm:$0xff]
    %v332 = vld [vmem:[#allocation8 + $0x250] sm:$0xff]
    %v333 = vld [vmem:[#allocation8 + $0x258] sm:$0xff]
    %v334 = vld [vmem:[#allocation8 + $0x260] sm:$0xff]
    %v335 = vld [vmem:[#allocation8 + $0x268] sm:$0xff]
    %v336 = vld [vmem:[#allocation8 + $0x270] sm:$0xff]
    %v337 = vld [vmem:[#allocation8 + $0x278] sm:$0xff]
    %v338 = vld [vmem:[#allocation8 + $0x280] sm:$0xff]
    %v339 = vld [vmem:[#allocation8 + $0x288] sm:$0xff]
    %v340 = vld [vmem:[#allocation8 + $0x290] sm:$0xff]
    %v341 = vld [vmem:[#allocation8 + $0x298] sm:$0xff]
    %v342 = vld [vmem:[#allocation8 + $0x2a0] sm:$0xff]
    %v343 = vld [vmem:[#allocation8 + $0x2a8] sm:$0xff]
    %v344 = vld [vmem:[#allocation8 + $0x2b0] sm:$0xff]
    %v345 = vld [vmem:[#allocation8 + $0x2b8] sm:$0xff]
    %v346 = vld [vmem:[#allocation8 + $0x2c0] sm:$0xff]
    %v347 = vld [vmem:[#allocation8 + $0x2c8] sm:$0xff]
    %v348 = vld [vmem:[#allocation8 + $0x2d0] sm:$0xff]
    %v349 = vld [vmem:[#allocation8 + $0x2d8] sm:$0xff]
    %v350 = vld [vmem:[#allocation8 + $0x2e0] sm:$0xff]
    %v351 = vld [vmem:[#allocation8 + $0x2e8] sm:$0xff]
    %v352 = vld [vmem:[#allocation8 + $0x2f0] sm:$0xff]
    %v353 = vld [vmem:[#allocation8 + $0x2f8] sm:$0xff]
    %v354 = vld [vmem:[#allocation8 + $0x300] sm:$0xff]
    %v355 = vld [vmem:[#allocation8 + $0x308] sm:$0xff]
    %v356 = vld [vmem:[#allocation8 + $0x310] sm:$0xff]
    %v357 = vld [vmem:[#allocation8 + $0x318] sm:$0xff]
    %v358 = vld [vmem:[#allocation8 + $0x320] sm:$0xff]
    %v359 = vld [vmem:[#allocation8 + $0x328] sm:$0xff]
    %v360 = vld [vmem:[#allocation8 + $0x330] sm:$0xff]
    %v361 = vld [vmem:[#allocation8 + $0x338] sm:$0xff]
    %v362 = vld [vmem:[#allocation8 + $0x340] sm:$0xff]
    %v363 = vld [vmem:[#allocation8 + $0x348] sm:$0xff]
    %v364 = vld [vmem:[#allocation8 + $0x350] sm:$0xff]
    %v365 = vld [vmem:[#allocation8 + $0x358] sm:$0xff]
    %v366 = vld [vmem:[#allocation8 + $0x360] sm:$0xff]
    %v367 = vld [vmem:[#allocation8 + $0x368] sm:$0xff]
    %v368 = vld [vmem:[#allocation8 + $0x370] sm:$0xff]
    %v369 = vld [vmem:[#allocation8 + $0x378] sm:$0xff]
    %v370 = vld [vmem:[#allocation8 + $0x380] sm:$0xff]
    %v371 = vld [vmem:[#allocation8 + $0x388] sm:$0xff]
    %v372 = vld [vmem:[#allocation8 + $0x390] sm:$0xff]
    %v373 = vld [vmem:[#allocation8 + $0x398] sm:$0xff]
    %v374 = vld [vmem:[#allocation8 + $0x3a0] sm:$0xff]
    %v375 = vld [vmem:[#allocation8 + $0x3a8] sm:$0xff]
    %v376 = vld [vmem:[#allocation8 + $0x3b0] sm:$0xff]
    %v377 = vld [vmem:[#allocation8 + $0x3b8] sm:$0xff]
    %v378 = vld [vmem:[#allocation8 + $0x3c0] sm:$0xff]
    %v379 = vld [vmem:[#allocation8 + $0x3c8] sm:$0xff]
    %v380 = vld [vmem:[#allocation8 + $0x3d0] sm:$0xff]
    %v381 = vld [vmem:[#allocation8 + $0x3d8] sm:$0xff]
    %v382 = vld [vmem:[#allocation8 + $0x3e0] sm:$0xff]
    %v383 = vld [vmem:[#allocation8 + $0x3e8] sm:$0xff]
    %v384 = vld [vmem:[#allocation8 + $0x3f0] sm:$0xff]
    %v385 = vld [vmem:[#allocation8 + $0x3f8] sm:$0xff]
    %v386 = vld [vmem:[%s4] sm:$0xf]
    %v388 = vlaneseq
    %v389 = vshrl.u32 %v388, 7
    %v390 = vsub.s32 0, %v389
    %v391 = vrot.slane %v386, %v390
    %v392 = vlaneseq
    %v393 = vshrl.u32 %v392, 7
    %v394 = vsub.s32 1, %v393
    %v395 = vrot.slane %v386, %v394
    %v396 = vlaneseq
    %v397 = vshrl.u32 %v396, 7
    %v398 = vsub.s32 2, %v397
    %v399 = vrot.slane %v386, %v398
    %v400 = vlaneseq
    %v401 = vshrl.u32 %v400, 7
    %v402 = vsub.s32 3, %v401
    %v403 = vrot.slane %v386, %v402
    %v536 = vunpack.c.l.b16 %v258
    %v537 = vunpack.c.h.b16 %v258
    %v538 = vunpack.c.l.b16 %v259
    %v539 = vunpack.c.h.b16 %v259
    %v540 = vunpack.c.l.b16 %v260
    %v541 = vunpack.c.h.b16 %v260
    %v542 = vunpack.c.l.b16 %v261
    %v543 = vunpack.c.h.b16 %v261
    %v544 = vunpack.c.l.b16 %v262
    %v545 = vunpack.c.h.b16 %v262
    %v546 = vunpack.c.l.b16 %v263
    %v547 = vunpack.c.h.b16 %v263
    %v548 = vunpack.c.l.b16 %v264
    %v549 = vunpack.c.h.b16 %v264
    %v550 = vunpack.c.l.b16 %v265
    %v551 = vunpack.c.h.b16 %v265
    %v552 = vunpack.c.l.b16 %v266
    %v553 = vunpack.c.h.b16 %v266
    %v554 = vunpack.c.l.b16 %v267
    %v555 = vunpack.c.h.b16 %v267
    %v556 = vunpack.c.l.b16 %v268
    %v557 = vunpack.c.h.b16 %v268
    %v558 = vunpack.c.l.b16 %v269
    %v559 = vunpack.c.h.b16 %v269
    %v560 = vunpack.c.l.b16 %v270
    %v561 = vunpack.c.h.b16 %v270
    %v562 = vunpack.c.l.b16 %v271
    %v563 = vunpack.c.h.b16 %v271
    %v564 = vunpack.c.l.b16 %v272
    %v565 = vunpack.c.h.b16 %v272
    %v566 = vunpack.c.l.b16 %v273
    %v567 = vunpack.c.h.b16 %v273
    %v568 = vunpack.c.l.b16 %v274
    %v569 = vunpack.c.h.b16 %v274
    %v570 = vunpack.c.l.b16 %v275
    %v571 = vunpack.c.h.b16 %v275
    %v572 = vunpack.c.l.b16 %v276
    %v573 = vunpack.c.h.b16 %v276
    %v574 = vunpack.c.l.b16 %v277
    %v575 = vunpack.c.h.b16 %v277
    %v576 = vunpack.c.l.b16 %v278
    %v577 = vunpack.c.h.b16 %v278
    %v578 = vunpack.c.l.b16 %v279
    %v579 = vunpack.c.h.b16 %v279
    %v580 = vunpack.c.l.b16 %v280
    %v581 = vunpack.c.h.b16 %v280
    %v582 = vunpack.c.l.b16 %v281
    %v583 = vunpack.c.h.b16 %v281
    %v584 = vunpack.c.l.b16 %v282
    %v585 = vunpack.c.h.b16 %v282
    %v586 = vunpack.c.l.b16 %v283
    %v587 = vunpack.c.h.b16 %v283
    %v588 = vunpack.c.l.b16 %v284
    %v589 = vunpack.c.h.b16 %v284
    %v590 = vunpack.c.l.b16 %v285
    %v591 = vunpack.c.h.b16 %v285
    %v592 = vunpack.c.l.b16 %v286
    %v593 = vunpack.c.h.b16 %v286
    %v594 = vunpack.c.l.b16 %v287
    %v595 = vunpack.c.h.b16 %v287
    %v596 = vunpack.c.l.b16 %v288
    %v597 = vunpack.c.h.b16 %v288
    %v598 = vunpack.c.l.b16 %v289
    %v599 = vunpack.c.h.b16 %v289
    %v600 = vunpack.c.l.b16 %v290
    %v601 = vunpack.c.h.b16 %v290
    %v602 = vunpack.c.l.b16 %v291
    %v603 = vunpack.c.h.b16 %v291
    %v604 = vunpack.c.l.b16 %v292
    %v605 = vunpack.c.h.b16 %v292
    %v606 = vunpack.c.l.b16 %v293
    %v607 = vunpack.c.h.b16 %v293
    %v608 = vunpack.c.l.b16 %v294
    %v609 = vunpack.c.h.b16 %v294
    %v610 = vunpack.c.l.b16 %v295
    %v611 = vunpack.c.h.b16 %v295
    %v612 = vunpack.c.l.b16 %v296
    %v613 = vunpack.c.h.b16 %v296
    %v614 = vunpack.c.l.b16 %v297
    %v615 = vunpack.c.h.b16 %v297
    %v616 = vunpack.c.l.b16 %v298
    %v617 = vunpack.c.h.b16 %v298
    %v618 = vunpack.c.l.b16 %v299
    %v619 = vunpack.c.h.b16 %v299
    %v620 = vunpack.c.l.b16 %v300
    %v621 = vunpack.c.h.b16 %v300
    %v622 = vunpack.c.l.b16 %v301
    %v623 = vunpack.c.h.b16 %v301
    %v624 = vunpack.c.l.b16 %v302
    %v625 = vunpack.c.h.b16 %v302
    %v626 = vunpack.c.l.b16 %v303
    %v627 = vunpack.c.h.b16 %v303
    %v628 = vunpack.c.l.b16 %v304
    %v629 = vunpack.c.h.b16 %v304
    %v630 = vunpack.c.l.b16 %v305
    %v631 = vunpack.c.h.b16 %v305
    %v632 = vunpack.c.l.b16 %v306
    %v633 = vunpack.c.h.b16 %v306
    %v634 = vunpack.c.l.b16 %v307
    %v635 = vunpack.c.h.b16 %v307
    %v636 = vunpack.c.l.b16 %v308
    %v637 = vunpack.c.h.b16 %v308
    %v638 = vunpack.c.l.b16 %v309
    %v639 = vunpack.c.h.b16 %v309
    %v640 = vunpack.c.l.b16 %v310
    %v641 = vunpack.c.h.b16 %v310
    %v642 = vunpack.c.l.b16 %v311
    %v643 = vunpack.c.h.b16 %v311
    %v644 = vunpack.c.l.b16 %v312
    %v645 = vunpack.c.h.b16 %v312
    %v646 = vunpack.c.l.b16 %v313
    %v647 = vunpack.c.h.b16 %v313
    %v648 = vunpack.c.l.b16 %v314
    %v649 = vunpack.c.h.b16 %v314
    %v650 = vunpack.c.l.b16 %v315
    %v651 = vunpack.c.h.b16 %v315
    %v652 = vunpack.c.l.b16 %v316
    %v653 = vunpack.c.h.b16 %v316
    %v654 = vunpack.c.l.b16 %v317
    %v655 = vunpack.c.h.b16 %v317
    %v656 = vunpack.c.l.b16 %v318
    %v657 = vunpack.c.h.b16 %v318
    %v658 = vunpack.c.l.b16 %v319
    %v659 = vunpack.c.h.b16 %v319
    %v660 = vunpack.c.l.b16 %v320
    %v661 = vunpack.c.h.b16 %v320
    %v662 = vunpack.c.l.b16 %v321
    %v663 = vunpack.c.h.b16 %v321
    %v664 = vunpack.c.l.b16 %v322
    %v665 = vunpack.c.h.b16 %v322
    %v666 = vunpack.c.l.b16 %v323
    %v667 = vunpack.c.h.b16 %v323
    %v668 = vunpack.c.l.b16 %v324
    %v669 = vunpack.c.h.b16 %v324
    %v670 = vunpack.c.l.b16 %v325
    %v671 = vunpack.c.h.b16 %v325
    %v672 = vunpack.c.l.b16 %v326
    %v673 = vunpack.c.h.b16 %v326
    %v674 = vunpack.c.l.b16 %v327
    %v675 = vunpack.c.h.b16 %v327
    %v676 = vunpack.c.l.b16 %v328
    %v677 = vunpack.c.h.b16 %v328
    %v678 = vunpack.c.l.b16 %v329
    %v679 = vunpack.c.h.b16 %v329
    %v680 = vunpack.c.l.b16 %v330
    %v681 = vunpack.c.h.b16 %v330
    %v682 = vunpack.c.l.b16 %v331
    %v683 = vunpack.c.h.b16 %v331
    %v684 = vunpack.c.l.b16 %v332
    %v685 = vunpack.c.h.b16 %v332
    %v686 = vunpack.c.l.b16 %v333
    %v687 = vunpack.c.h.b16 %v333
    %v688 = vunpack.c.l.b16 %v334
    %v689 = vunpack.c.h.b16 %v334
    %v690 = vunpack.c.l.b16 %v335
    %v691 = vunpack.c.h.b16 %v335
    %v692 = vunpack.c.l.b16 %v336
    %v693 = vunpack.c.h.b16 %v336
    %v694 = vunpack.c.l.b16 %v337
    %v695 = vunpack.c.h.b16 %v337
    %v696 = vunpack.c.l.b16 %v338
    %v697 = vunpack.c.h.b16 %v338
    %v698 = vunpack.c.l.b16 %v339
    %v699 = vunpack.c.h.b16 %v339
    %v700 = vunpack.c.l.b16 %v340
    %v701 = vunpack.c.h.b16 %v340
    %v702 = vunpack.c.l.b16 %v341
    %v703 = vunpack.c.h.b16 %v341
    %v704 = vunpack.c.l.b16 %v342
    %v705 = vunpack.c.h.b16 %v342
    %v706 = vunpack.c.l.b16 %v343
    %v707 = vunpack.c.h.b16 %v343
    %v708 = vunpack.c.l.b16 %v344
    %v709 = vunpack.c.h.b16 %v344
    %v710 = vunpack.c.l.b16 %v345
    %v711 = vunpack.c.h.b16 %v345
    %v712 = vunpack.c.l.b16 %v346
    %v713 = vunpack.c.h.b16 %v346
    %v714 = vunpack.c.l.b16 %v347
    %v715 = vunpack.c.h.b16 %v347
    %v716 = vunpack.c.l.b16 %v348
    %v717 = vunpack.c.h.b16 %v348
    %v718 = vunpack.c.l.b16 %v349
    %v719 = vunpack.c.h.b16 %v349
    %v720 = vunpack.c.l.b16 %v350
    %v721 = vunpack.c.h.b16 %v350
    %v722 = vunpack.c.l.b16 %v351
    %v723 = vunpack.c.h.b16 %v351
    %v724 = vunpack.c.l.b16 %v352
    %v725 = vunpack.c.h.b16 %v352
    %v726 = vunpack.c.l.b16 %v353
    %v727 = vunpack.c.h.b16 %v353
    %v728 = vunpack.c.l.b16 %v354
    %v729 = vunpack.c.h.b16 %v354
    %v730 = vunpack.c.l.b16 %v355
    %v731 = vunpack.c.h.b16 %v355
    %v732 = vunpack.c.l.b16 %v356
    %v733 = vunpack.c.h.b16 %v356
    %v734 = vunpack.c.l.b16 %v357
    %v735 = vunpack.c.h.b16 %v357
    %v736 = vunpack.c.l.b16 %v358
    %v737 = vunpack.c.h.b16 %v358
    %v738 = vunpack.c.l.b16 %v359
    %v739 = vunpack.c.h.b16 %v359
    %v740 = vunpack.c.l.b16 %v360
    %v741 = vunpack.c.h.b16 %v360
    %v742 = vunpack.c.l.b16 %v361
    %v743 = vunpack.c.h.b16 %v361
    %v744 = vunpack.c.l.b16 %v362
    %v745 = vunpack.c.h.b16 %v362
    %v746 = vunpack.c.l.b16 %v363
    %v747 = vunpack.c.h.b16 %v363
    %v748 = vunpack.c.l.b16 %v364
    %v749 = vunpack.c.h.b16 %v364
    %v750 = vunpack.c.l.b16 %v365
    %v751 = vunpack.c.h.b16 %v365
    %v752 = vunpack.c.l.b16 %v366
    %v753 = vunpack.c.h.b16 %v366
    %v754 = vunpack.c.l.b16 %v367
    %v755 = vunpack.c.h.b16 %v367
    %v756 = vunpack.c.l.b16 %v368
    %v757 = vunpack.c.h.b16 %v368
    %v758 = vunpack.c.l.b16 %v369
    %v759 = vunpack.c.h.b16 %v369
    %v760 = vunpack.c.l.b16 %v370
    %v761 = vunpack.c.h.b16 %v370
    %v762 = vunpack.c.l.b16 %v371
    %v763 = vunpack.c.h.b16 %v371
    %v764 = vunpack.c.l.b16 %v372
    %v765 = vunpack.c.h.b16 %v372
    %v766 = vunpack.c.l.b16 %v373
    %v767 = vunpack.c.h.b16 %v373
    %v768 = vunpack.c.l.b16 %v374
    %v769 = vunpack.c.h.b16 %v374
    %v770 = vunpack.c.l.b16 %v375
    %v771 = vunpack.c.h.b16 %v375
    %v772 = vunpack.c.l.b16 %v376
    %v773 = vunpack.c.h.b16 %v376
    %v774 = vunpack.c.l.b16 %v377
    %v775 = vunpack.c.h.b16 %v377
    %v776 = vunpack.c.l.b16 %v378
    %v777 = vunpack.c.h.b16 %v378
    %v778 = vunpack.c.l.b16 %v379
    %v779 = vunpack.c.h.b16 %v379
    %v780 = vunpack.c.l.b16 %v380
    %v781 = vunpack.c.h.b16 %v380
    %v782 = vunpack.c.l.b16 %v381
    %v783 = vunpack.c.h.b16 %v381
    %v784 = vunpack.c.l.b16 %v382
    %v785 = vunpack.c.h.b16 %v382
    %v786 = vunpack.c.l.b16 %v383
    %v787 = vunpack.c.h.b16 %v383
    %v788 = vunpack.c.l.b16 %v384
    %v789 = vunpack.c.h.b16 %v384
    %v790 = vunpack.c.l.b16 %v385
    %v791 = vunpack.c.h.b16 %v385
    %v792 = vpack.c.b16 %v540, %v536
    %v793 = vpack.c.b16 %v541, %v537
    %v794 = vpack.c.b16 %v542, %v538
    %v795 = vpack.c.b16 %v543, %v539
    %v796 = vpack.c.b16 %v548, %v544
    %v797 = vpack.c.b16 %v549, %v545
    %v798 = vpack.c.b16 %v550, %v546
    %v799 = vpack.c.b16 %v551, %v547
    %v800 = vpack.c.b16 %v556, %v552
    %v801 = vpack.c.b16 %v557, %v553
    %v802 = vpack.c.b16 %v558, %v554
    %v803 = vpack.c.b16 %v559, %v555
    %v804 = vpack.c.b16 %v564, %v560
    %v805 = vpack.c.b16 %v565, %v561
    %v806 = vpack.c.b16 %v566, %v562
    %v807 = vpack.c.b16 %v567, %v563
    %v808 = vpack.c.b16 %v572, %v568
    %v809 = vpack.c.b16 %v573, %v569
    %v810 = vpack.c.b16 %v574, %v570
    %v811 = vpack.c.b16 %v575, %v571
    %v812 = vpack.c.b16 %v580, %v576
    %v813 = vpack.c.b16 %v581, %v577
    %v814 = vpack.c.b16 %v582, %v578
    %v815 = vpack.c.b16 %v583, %v579
    %v816 = vpack.c.b16 %v588, %v584
    %v817 = vpack.c.b16 %v589, %v585
    %v818 = vpack.c.b16 %v590, %v586
    %v819 = vpack.c.b16 %v591, %v587
    %v820 = vpack.c.b16 %v596, %v592
    %v821 = vpack.c.b16 %v597, %v593
    %v822 = vpack.c.b16 %v598, %v594
    %v823 = vpack.c.b16 %v599, %v595
    %v824 = vpack.c.b16 %v604, %v600
    %v825 = vpack.c.b16 %v605, %v601
    %v826 = vpack.c.b16 %v606, %v602
    %v827 = vpack.c.b16 %v607, %v603
    %v828 = vpack.c.b16 %v612, %v608
    %v829 = vpack.c.b16 %v613, %v609
    %v830 = vpack.c.b16 %v614, %v610
    %v831 = vpack.c.b16 %v615, %v611
    %v832 = vpack.c.b16 %v620, %v616
    %v833 = vpack.c.b16 %v621, %v617
    %v834 = vpack.c.b16 %v622, %v618
    %v835 = vpack.c.b16 %v623, %v619
    %v836 = vpack.c.b16 %v628, %v624
    %v837 = vpack.c.b16 %v629, %v625
    %v838 = vpack.c.b16 %v630, %v626
    %v839 = vpack.c.b16 %v631, %v627
    %v840 = vpack.c.b16 %v636, %v632
    %v841 = vpack.c.b16 %v637, %v633
    %v842 = vpack.c.b16 %v638, %v634
    %v843 = vpack.c.b16 %v639, %v635
    %v844 = vpack.c.b16 %v644, %v640
    %v845 = vpack.c.b16 %v645, %v641
    %v846 = vpack.c.b16 %v646, %v642
    %v847 = vpack.c.b16 %v647, %v643
    %v848 = vpack.c.b16 %v652, %v648
    %v849 = vpack.c.b16 %v653, %v649
    %v850 = vpack.c.b16 %v654, %v650
    %v851 = vpack.c.b16 %v655, %v651
    %v852 = vpack.c.b16 %v660, %v656
    %v853 = vpack.c.b16 %v661, %v657
    %v854 = vpack.c.b16 %v662, %v658
    %v855 = vpack.c.b16 %v663, %v659
    %v856 = vpack.c.b16 %v668, %v664
    %v857 = vpack.c.b16 %v669, %v665
    %v858 = vpack.c.b16 %v670, %v666
    %v859 = vpack.c.b16 %v671, %v667
    %v860 = vpack.c.b16 %v676, %v672
    %v861 = vpack.c.b16 %v677, %v673
    %v862 = vpack.c.b16 %v678, %v674
    %v863 = vpack.c.b16 %v679, %v675
    %v864 = vpack.c.b16 %v684, %v680
    %v865 = vpack.c.b16 %v685, %v681
    %v866 = vpack.c.b16 %v686, %v682
    %v867 = vpack.c.b16 %v687, %v683
    %v868 = vpack.c.b16 %v692, %v688
    %v869 = vpack.c.b16 %v693, %v689
    %v870 = vpack.c.b16 %v694, %v690
    %v871 = vpack.c.b16 %v695, %v691
    %v872 = vpack.c.b16 %v700, %v696
    %v873 = vpack.c.b16 %v701, %v697
    %v874 = vpack.c.b16 %v702, %v698
    %v875 = vpack.c.b16 %v703, %v699
    %v876 = vpack.c.b16 %v708, %v704
    %v877 = vpack.c.b16 %v709, %v705
    %v878 = vpack.c.b16 %v710, %v706
    %v879 = vpack.c.b16 %v711, %v707
    %v880 = vpack.c.b16 %v716, %v712
    %v881 = vpack.c.b16 %v717, %v713
    %v882 = vpack.c.b16 %v718, %v714
    %v883 = vpack.c.b16 %v719, %v715
    %v884 = vpack.c.b16 %v724, %v720
    %v885 = vpack.c.b16 %v725, %v721
    %v886 = vpack.c.b16 %v726, %v722
    %v887 = vpack.c.b16 %v727, %v723
    %v888 = vpack.c.b16 %v732, %v728
    %v889 = vpack.c.b16 %v733, %v729
    %v890 = vpack.c.b16 %v734, %v730
    %v891 = vpack.c.b16 %v735, %v731
    %v892 = vpack.c.b16 %v740, %v736
    %v893 = vpack.c.b16 %v741, %v737
    %v894 = vpack.c.b16 %v742, %v738
    %v895 = vpack.c.b16 %v743, %v739
    %v896 = vpack.c.b16 %v748, %v744
    %v897 = vpack.c.b16 %v749, %v745
    %v898 = vpack.c.b16 %v750, %v746
    %v899 = vpack.c.b16 %v751, %v747
    %v900 = vpack.c.b16 %v756, %v752
    %v901 = vpack.c.b16 %v757, %v753
    %v902 = vpack.c.b16 %v758, %v754
    %v903 = vpack.c.b16 %v759, %v755
    %v904 = vpack.c.b16 %v764, %v760
    %v905 = vpack.c.b16 %v765, %v761
    %v906 = vpack.c.b16 %v766, %v762
    %v907 = vpack.c.b16 %v767, %v763
    %v908 = vpack.c.b16 %v772, %v768
    %v909 = vpack.c.b16 %v773, %v769
    %v910 = vpack.c.b16 %v774, %v770
    %v911 = vpack.c.b16 %v775, %v771
    %v912 = vpack.c.b16 %v780, %v776
    %v913 = vpack.c.b16 %v781, %v777
    %v914 = vpack.c.b16 %v782, %v778
    %v915 = vpack.c.b16 %v783, %v779
    %v916 = vpack.c.b16 %v788, %v784
    %v917 = vpack.c.b16 %v789, %v785
    %v918 = vpack.c.b16 %v790, %v786
    %v919 = vpack.c.b16 %v791, %v787
    %1048 = vmatprep.subr.bf16.mxu0 %v821
    %1049 = vmatpush1.bf16.msra.mxu0 %v820
    %1050 = vmatprep.subr.bf16.mxu0 %v817
    %1051 = vmatpush1.bf16.msra.mxu0 %v816
    %1052 = vmatprep.subr.bf16.mxu0 %v813
    %1053 = vmatpush1.bf16.msra.mxu0 %v812
    %1054 = vmatprep.subr.bf16.mxu0 %v809
    %1055 = vmatpush1.bf16.msra.mxu0 %v808
    %1056 = vmatprep.subr.bf16.mxu0 %v805
    %1057 = vmatpush1.bf16.msra.mxu0 %v804
    %1058 = vmatprep.subr.bf16.mxu0 %v801
    %1059 = vmatpush1.bf16.msra.mxu0 %v800
    %1060 = vmatprep.subr.bf16.mxu0 %v797
    %1061 = vmatpush1.bf16.msra.mxu0 %v796
    %1062 = vmatprep.subr.bf16.mxu0 %v793
    %1063 = vmatpush1.bf16.msra.mxu0 %v792
    %1064 = vmatprep.subr.bf16.mxu0 %v853
    %1065 = vmatpush2.bf16.msra.mxu0 %v852
    %1066 = vmatprep.subr.bf16.mxu0 %v849
    %1067 = vmatpush2.bf16.msra.mxu0 %v848
    %1068 = vmatprep.subr.bf16.mxu0 %v845
    %1069 = vmatpush2.bf16.msra.mxu0 %v844
    %1070 = vmatprep.subr.bf16.mxu0 %v841
    %1071 = vmatpush2.bf16.msra.mxu0 %v840
    %1072 = vmatprep.subr.bf16.mxu0 %v837
    %1073 = vmatpush2.bf16.msra.mxu0 %v836
    %1074 = vmatprep.subr.bf16.mxu0 %v833
    %1075 = vmatpush2.bf16.msra.mxu0 %v832
    %1076 = vmatprep.subr.bf16.mxu0 %v829
    %1077 = vmatpush2.bf16.msra.mxu0 %v828
    %1078 = vmatprep.subr.bf16.mxu0 %v825
    %1079 = vmatpush2.bf16.msra.mxu0 %v824
    %1080 = vmatprep.mubr.bf16.mxu0 %v255
    %1081 = vmatmul.mubr.bf16.gmra.mxu0 %v254
    %v1082 = vpop.f32.mrf.mxu0
    %v1083 = vadd.f32 %v391, %v1082
    %v1084 = vpop.f32.mrf.mxu0
    %v1085 = vadd.f32 %v395, %v1084
    %v1086 = vpop.f32.mrf.mxu0
    %v1087 = vpop.f32.mrf.mxu0
    %1088 = vdwg.mxu0
    %1089 = vmatprep.subr.bf16.mxu0 %v885
    %1090 = vmatpush1.bf16.msra.mxu0 %v884
    %1091 = vmatprep.subr.bf16.mxu0 %v881
    %1092 = vmatpush1.bf16.msra.mxu0 %v880
    %1093 = vmatprep.subr.bf16.mxu0 %v877
    %1094 = vmatpush1.bf16.msra.mxu0 %v876
    %1095 = vmatprep.subr.bf16.mxu0 %v873
    %1096 = vmatpush1.bf16.msra.mxu0 %v872
    %1097 = vmatprep.subr.bf16.mxu0 %v869
    %1098 = vmatpush1.bf16.msra.mxu0 %v868
    %1099 = vmatprep.subr.bf16.mxu0 %v865
    %1100 = vmatpush1.bf16.msra.mxu0 %v864
    %1101 = vmatprep.subr.bf16.mxu0 %v861
    %1102 = vmatpush1.bf16.msra.mxu0 %v860
    %1103 = vmatprep.subr.bf16.mxu0 %v857
    %1104 = vmatpush1.bf16.msra.mxu0 %v856
    %1105 = vmatprep.subr.bf16.mxu0 %v917
    %1106 = vmatpush2.bf16.msra.mxu0 %v916
    %1107 = vmatprep.subr.bf16.mxu0 %v913
    %1108 = vmatpush2.bf16.msra.mxu0 %v912
    %1109 = vmatprep.subr.bf16.mxu0 %v909
    %1110 = vmatpush2.bf16.msra.mxu0 %v908
    %1111 = vmatprep.subr.bf16.mxu0 %v905
    %1112 = vmatpush2.bf16.msra.mxu0 %v904
    %1113 = vmatprep.subr.bf16.mxu0 %v901
    %1114 = vmatpush2.bf16.msra.mxu0 %v900
    %1115 = vmatprep.subr.bf16.mxu0 %v897
    %1116 = vmatpush2.bf16.msra.mxu0 %v896
    %1117 = vmatprep.subr.bf16.mxu0 %v893
    %1118 = vmatpush2.bf16.msra.mxu0 %v892
    %1119 = vmatprep.subr.bf16.mxu0 %v889
    %1120 = vmatpush2.bf16.msra.mxu0 %v888
    %1121 = vmatprep.mubr.bf16.mxu0 %v257
    %1122 = vmatmul.mubr.bf16.gmra.mxu0 %v256
    %v1123 = vpop.f32.mrf.mxu0
    %v1124 = vadd.f32 %v1083, %v1123
    %v1125 = vpop.f32.mrf.mxu0
    %v1126 = vadd.f32 %v1085, %v1125
    %v1127 = vpop.f32.mrf.mxu0
    %v1128 = vpop.f32.mrf.mxu0
    %1129 = vdwg.mxu0
    %1130 = vmatprep.subr.bf16.mxu0 %v823
    %1131 = vmatpush1.bf16.msra.mxu0 %v822
    %1132 = vmatprep.subr.bf16.mxu0 %v819
    %1133 = vmatpush1.bf16.msra.mxu0 %v818
    %1134 = vmatprep.subr.bf16.mxu0 %v815
    %1135 = vmatpush1.bf16.msra.mxu0 %v814
    %1136 = vmatprep.subr.bf16.mxu0 %v811
    %1137 = vmatpush1.bf16.msra.mxu0 %v810
    %1138 = vmatprep.subr.bf16.mxu0 %v807
    %1139 = vmatpush1.bf16.msra.mxu0 %v806
    %1140 = vmatprep.subr.bf16.mxu0 %v803
    %1141 = vmatpush1.bf16.msra.mxu0 %v802
    %1142 = vmatprep.subr.bf16.mxu0 %v799
    %1143 = vmatpush1.bf16.msra.mxu0 %v798
    %1144 = vmatprep.subr.bf16.mxu0 %v795
    %1145 = vmatpush1.bf16.msra.mxu0 %v794
    %1146 = vmatprep.subr.bf16.mxu0 %v855
    %1147 = vmatpush2.bf16.msra.mxu0 %v854
    %1148 = vmatprep.subr.bf16.mxu0 %v851
    %1149 = vmatpush2.bf16.msra.mxu0 %v850
    %1150 = vmatprep.subr.bf16.mxu0 %v847
    %1151 = vmatpush2.bf16.msra.mxu0 %v846
    %1152 = vmatprep.subr.bf16.mxu0 %v843
    %1153 = vmatpush2.bf16.msra.mxu0 %v842
    %1154 = vmatprep.subr.bf16.mxu0 %v839
    %1155 = vmatpush2.bf16.msra.mxu0 %v838
    %1156 = vmatprep.subr.bf16.mxu0 %v835
    %1157 = vmatpush2.bf16.msra.mxu0 %v834
    %1158 = vmatprep.subr.bf16.mxu0 %v831
    %1159 = vmatpush2.bf16.msra.mxu0 %v830
    %1160 = vmatprep.subr.bf16.mxu0 %v827
    %1161 = vmatpush2.bf16.msra.mxu0 %v826
    %1162 = vmatprep.mubr.bf16.mxu0 %v255
    %1163 = vmatmul.mubr.bf16.gmra.mxu0 %v254
    %v1164 = vpop.f32.mrf.mxu0
    %v1165 = vadd.f32 %v399, %v1164
    %v1166 = vpop.f32.mrf.mxu0
    %v1167 = vadd.f32 %v403, %v1166
    %v1168 = vpop.f32.mrf.mxu0
    %v1169 = vpop.f32.mrf.mxu0
    %1170 = vdwg.mxu0
    %1171 = vmatprep.subr.bf16.mxu0 %v887
    %1172 = vmatpush1.bf16.msra.mxu0 %v886
    %1173 = vmatprep.subr.bf16.mxu0 %v883
    %1174 = vmatpush1.bf16.msra.mxu0 %v882
    %1175 = vmatprep.subr.bf16.mxu0 %v879
    %1176 = vmatpush1.bf16.msra.mxu0 %v878
    %1177 = vmatprep.subr.bf16.mxu0 %v875
    %1178 = vmatpush1.bf16.msra.mxu0 %v874
    %1179 = vmatprep.subr.bf16.mxu0 %v871
    %1180 = vmatpush1.bf16.msra.mxu0 %v870
    %1181 = vmatprep.subr.bf16.mxu0 %v867
    %1182 = vmatpush1.bf16.msra.mxu0 %v866
    %1183 = vmatprep.subr.bf16.mxu0 %v863
    %1184 = vmatpush1.bf16.msra.mxu0 %v862
    %1185 = vmatprep.subr.bf16.mxu0 %v859
    %1186 = vmatpush1.bf16.msra.mxu0 %v858
    %1187 = vmatprep.subr.bf16.mxu0 %v919
    %1188 = vmatpush2.bf16.msra.mxu0 %v918
    %1189 = vmatprep.subr.bf16.mxu0 %v915
    %1190 = vmatpush2.bf16.msra.mxu0 %v914
    %1191 = vmatprep.subr.bf16.mxu0 %v911
    %1192 = vmatpush2.bf16.msra.mxu0 %v910
    %1193 = vmatprep.subr.bf16.mxu0 %v907
    %1194 = vmatpush2.bf16.msra.mxu0 %v906
    %1195 = vmatprep.subr.bf16.mxu0 %v903
    %1196 = vmatpush2.bf16.msra.mxu0 %v902
    %1197 = vmatprep.subr.bf16.mxu0 %v899
    %1198 = vmatpush2.bf16.msra.mxu0 %v898
    %1199 = vmatprep.subr.bf16.mxu0 %v895
    %1200 = vmatpush2.bf16.msra.mxu0 %v894
    %1201 = vmatprep.subr.bf16.mxu0 %v891
    %1202 = vmatpush2.bf16.msra.mxu0 %v890
    %1203 = vmatprep.mubr.bf16.mxu0 %v257
    %1204 = vmatmul.mubr.bf16.gmra.mxu0 %v256
    %v1205 = vpop.f32.mrf.mxu0
    %v1206 = vadd.f32 %v1165, %v1205
    %v1207 = vpop.f32.mrf.mxu0
    %v1208 = vadd.f32 %v1167, %v1207
    %v1209 = vpop.f32.mrf.mxu0
    %v1210 = vpop.f32.mrf.mxu0
    %1211 = vdwg.mxu0
    %v1212 = vxor.u32 %v1124, 2147483648
    %v1213 = vxor.u32 %v1126, 2147483648
    %v1214 = vxor.u32 %v1206, 2147483648
    %v1215 = vxor.u32 %v1208, 2147483648
    %v1216 = vmul.f32 %v1212, 1.442695
    %v1217 = vpow.pop %v1216
    %v1218 = vmul.f32 %v1213, 1.442695
    %v1219 = vpow.pop %v1218
    %v1220 = vmul.f32 %v1214, 1.442695
    %v1221 = vpow.pop %v1220
    %v1222 = vmul.f32 %v1215, 1.442695
    %v1223 = vpow.pop %v1222
    %v1224 = vadd.f32 %v1217, 1.0
    %v1225 = vadd.f32 %v1219, 1.0
    %v1226 = vadd.f32 %v1221, 1.0
    %v1227 = vadd.f32 %v1223, 1.0
    %v1228 = vrcp.pop %v1224
    %v1229 = vmul.f32 1.0, %v1228
    %v1230 = vrcp.pop %v1225
    %v1231 = vmul.f32 1.0, %v1230
    %v1232 = vrcp.pop %v1226
    %v1233 = vmul.f32 1.0, %v1232
    %v1234 = vrcp.pop %v1227
    %v1235 = vmul.f32 1.0, %v1234
    %v1236 = vmul.f32 %v1124, %v1229
    %v1237 = vmul.f32 %v1126, %v1231
    %v1238 = vmul.f32 %v1206, %v1233
    %v1239 = vmul.f32 %v1208, %v1235
    %v1240 = vpack.c.bf16 %v1236, %v1236
    %v1241 = vpack.c.bf16 %v1237, %v1237
    %v1242 = vpack.c.bf16 %v1238, %v1238
    %v1243 = vpack.c.bf16 %v1239, %v1239
    %v1244 = vld [vmem:[#allocation10] sm:$0xf]
    %v1245 = vld [vmem:[#allocation10 + $0x4] sm:$0xf]
    %v1246 = vld [vmem:[#allocation10 + $0x8] sm:$0xf]
    %v1247 = vld [vmem:[#allocation10 + $0xc] sm:$0xf]
    %v1248 = vld [vmem:[#allocation10 + $0x10] sm:$0xf]
    %v1249 = vld [vmem:[#allocation10 + $0x14] sm:$0xf]
    %v1250 = vld [vmem:[#allocation10 + $0x18] sm:$0xf]
    %v1251 = vld [vmem:[#allocation10 + $0x1c] sm:$0xf]
    %v1252 = vld [vmem:[#allocation10 + $0x20] sm:$0xf]
    %v1253 = vld [vmem:[#allocation10 + $0x24] sm:$0xf]
    %v1254 = vld [vmem:[#allocation10 + $0x28] sm:$0xf]
    %v1255 = vld [vmem:[#allocation10 + $0x2c] sm:$0xf]
    %v1256 = vld [vmem:[#allocation10 + $0x30] sm:$0xf]
    %v1257 = vld [vmem:[#allocation10 + $0x34] sm:$0xf]
    %v1258 = vld [vmem:[#allocation10 + $0x38] sm:$0xf]
    %v1259 = vld [vmem:[#allocation10 + $0x3c] sm:$0xf]
    %v1260 = vld [vmem:[#allocation10 + $0x40] sm:$0xf]
    %v1261 = vld [vmem:[#allocation10 + $0x44] sm:$0xf]
    %v1262 = vld [vmem:[#allocation10 + $0x48] sm:$0xf]
    %v1263 = vld [vmem:[#allocation10 + $0x4c] sm:$0xf]
    %v1264 = vld [vmem:[#allocation10 + $0x50] sm:$0xf]
    %v1265 = vld [vmem:[#allocation10 + $0x54] sm:$0xf]
    %v1266 = vld [vmem:[#allocation10 + $0x58] sm:$0xf]
    %v1267 = vld [vmem:[#allocation10 + $0x5c] sm:$0xf]
    %v1268 = vld [vmem:[#allocation10 + $0x60] sm:$0xf]
    %v1269 = vld [vmem:[#allocation10 + $0x64] sm:$0xf]
    %v1270 = vld [vmem:[#allocation10 + $0x68] sm:$0xf]
    %v1271 = vld [vmem:[#allocation10 + $0x6c] sm:$0xf]
    %v1272 = vld [vmem:[#allocation10 + $0x70] sm:$0xf]
    %v1273 = vld [vmem:[#allocation10 + $0x74] sm:$0xf]
    %v1274 = vld [vmem:[#allocation10 + $0x78] sm:$0xf]
    %v1275 = vld [vmem:[#allocation10 + $0x7c] sm:$0xf]
    %v1276 = vld [vmem:[#allocation10 + $0x80] sm:$0xf]
    %v1277 = vld [vmem:[#allocation10 + $0x84] sm:$0xf]
    %v1278 = vld [vmem:[#allocation10 + $0x88] sm:$0xf]
    %v1279 = vld [vmem:[#allocation10 + $0x8c] sm:$0xf]
    %v1280 = vld [vmem:[#allocation10 + $0x90] sm:$0xf]
    %v1281 = vld [vmem:[#allocation10 + $0x94] sm:$0xf]
    %v1282 = vld [vmem:[#allocation10 + $0x98] sm:$0xf]
    %v1283 = vld [vmem:[#allocation10 + $0x9c] sm:$0xf]
    %v1284 = vld [vmem:[#allocation10 + $0xa0] sm:$0xf]
    %v1285 = vld [vmem:[#allocation10 + $0xa4] sm:$0xf]
    %v1286 = vld [vmem:[#allocation10 + $0xa8] sm:$0xf]
    %v1287 = vld [vmem:[#allocation10 + $0xac] sm:$0xf]
    %v1288 = vld [vmem:[#allocation10 + $0xb0] sm:$0xf]
    %v1289 = vld [vmem:[#allocation10 + $0xb4] sm:$0xf]
    %v1290 = vld [vmem:[#allocation10 + $0xb8] sm:$0xf]
    %v1291 = vld [vmem:[#allocation10 + $0xbc] sm:$0xf]
    %v1292 = vld [vmem:[#allocation10 + $0xc0] sm:$0xf]
    %v1293 = vld [vmem:[#allocation10 + $0xc4] sm:$0xf]
    %v1294 = vld [vmem:[#allocation10 + $0xc8] sm:$0xf]
    %v1295 = vld [vmem:[#allocation10 + $0xcc] sm:$0xf]
    %v1296 = vld [vmem:[#allocation10 + $0xd0] sm:$0xf]
    %v1297 = vld [vmem:[#allocation10 + $0xd4] sm:$0xf]
    %v1298 = vld [vmem:[#allocation10 + $0xd8] sm:$0xf]
    %v1299 = vld [vmem:[#allocation10 + $0xdc] sm:$0xf]
    %v1300 = vld [vmem:[#allocation10 + $0xe0] sm:$0xf]
    %v1301 = vld [vmem:[#allocation10 + $0xe4] sm:$0xf]
    %v1302 = vld [vmem:[#allocation10 + $0xe8] sm:$0xf]
    %v1303 = vld [vmem:[#allocation10 + $0xec] sm:$0xf]
    %v1304 = vld [vmem:[#allocation10 + $0xf0] sm:$0xf]
    %v1305 = vld [vmem:[#allocation10 + $0xf4] sm:$0xf]
    %v1306 = vld [vmem:[#allocation10 + $0xf8] sm:$0xf]
    %v1307 = vld [vmem:[#allocation10 + $0xfc] sm:$0xf]
    %v1308 = vld [vmem:[%s6] sm:$0x1]
    %v1310 = vlaneseq
    %v1311 = vshrl.u32 %v1310, 7
    %v1312 = vsub.s32 0, %v1311
    %v1313 = vrot.slane %v1308, %v1312
    %v1379 = vunpack.c.l.b16 %v1244
    %v1380 = vunpack.c.l.b16 %v1245
    %v1381 = vunpack.c.l.b16 %v1246
    %v1382 = vunpack.c.l.b16 %v1247
    %v1383 = vunpack.c.l.b16 %v1248
    %v1384 = vunpack.c.l.b16 %v1249
    %v1385 = vunpack.c.l.b16 %v1250
    %v1386 = vunpack.c.l.b16 %v1251
    %v1387 = vunpack.c.l.b16 %v1252
    %v1388 = vunpack.c.l.b16 %v1253
    %v1389 = vunpack.c.l.b16 %v1254
    %v1390 = vunpack.c.l.b16 %v1255
    %v1391 = vunpack.c.l.b16 %v1256
    %v1392 = vunpack.c.l.b16 %v1257
    %v1393 = vunpack.c.l.b16 %v1258
    %v1394 = vunpack.c.l.b16 %v1259
    %v1395 = vunpack.c.l.b16 %v1260
    %v1396 = vunpack.c.l.b16 %v1261
    %v1397 = vunpack.c.l.b16 %v1262
    %v1398 = vunpack.c.l.b16 %v1263
    %v1399 = vunpack.c.l.b16 %v1264
    %v1400 = vunpack.c.l.b16 %v1265
    %v1401 = vunpack.c.l.b16 %v1266
    %v1402 = vunpack.c.l.b16 %v1267
    %v1403 = vunpack.c.l.b16 %v1268
    %v1404 = vunpack.c.l.b16 %v1269
    %v1405 = vunpack.c.l.b16 %v1270
    %v1406 = vunpack.c.l.b16 %v1271
    %v1407 = vunpack.c.l.b16 %v1272
    %v1408 = vunpack.c.l.b16 %v1273
    %v1409 = vunpack.c.l.b16 %v1274
    %v1410 = vunpack.c.l.b16 %v1275
    %v1411 = vunpack.c.l.b16 %v1276
    %v1412 = vunpack.c.l.b16 %v1277
    %v1413 = vunpack.c.l.b16 %v1278
    %v1414 = vunpack.c.l.b16 %v1279
    %v1415 = vunpack.c.l.b16 %v1280
    %v1416 = vunpack.c.l.b16 %v1281
    %v1417 = vunpack.c.l.b16 %v1282
    %v1418 = vunpack.c.l.b16 %v1283
    %v1419 = vunpack.c.l.b16 %v1284
    %v1420 = vunpack.c.l.b16 %v1285
    %v1421 = vunpack.c.l.b16 %v1286
    %v1422 = vunpack.c.l.b16 %v1287
    %v1423 = vunpack.c.l.b16 %v1288
    %v1424 = vunpack.c.l.b16 %v1289
    %v1425 = vunpack.c.l.b16 %v1290
    %v1426 = vunpack.c.l.b16 %v1291
    %v1427 = vunpack.c.l.b16 %v1292
    %v1428 = vunpack.c.l.b16 %v1293
    %v1429 = vunpack.c.l.b16 %v1294
    %v1430 = vunpack.c.l.b16 %v1295
    %v1431 = vunpack.c.l.b16 %v1296
    %v1432 = vunpack.c.l.b16 %v1297
    %v1433 = vunpack.c.l.b16 %v1298
    %v1434 = vunpack.c.l.b16 %v1299
    %v1435 = vunpack.c.l.b16 %v1300
    %v1436 = vunpack.c.l.b16 %v1301
    %v1437 = vunpack.c.l.b16 %v1302
    %v1438 = vunpack.c.l.b16 %v1303
    %v1439 = vunpack.c.l.b16 %v1304
    %v1440 = vunpack.c.l.b16 %v1305
    %v1441 = vunpack.c.l.b16 %v1306
    %v1442 = vunpack.c.l.b16 %v1307
    %v1443 = vpack.c.b16 %v1380, %v1379
    %v1444 = vpack.c.b16 %v1382, %v1381
    %v1445 = vpack.c.b16 %v1384, %v1383
    %v1446 = vpack.c.b16 %v1386, %v1385
    %v1447 = vpack.c.b16 %v1388, %v1387
    %v1448 = vpack.c.b16 %v1390, %v1389
    %v1449 = vpack.c.b16 %v1392, %v1391
    %v1450 = vpack.c.b16 %v1394, %v1393
    %v1451 = vpack.c.b16 %v1396, %v1395
    %v1452 = vpack.c.b16 %v1398, %v1397
    %v1453 = vpack.c.b16 %v1400, %v1399
    %v1454 = vpack.c.b16 %v1402, %v1401
    %v1455 = vpack.c.b16 %v1404, %v1403
    %v1456 = vpack.c.b16 %v1406, %v1405
    %v1457 = vpack.c.b16 %v1408, %v1407
    %v1458 = vpack.c.b16 %v1410, %v1409
    %v1459 = vpack.c.b16 %v1412, %v1411
    %v1460 = vpack.c.b16 %v1414, %v1413
    %v1461 = vpack.c.b16 %v1416, %v1415
    %v1462 = vpack.c.b16 %v1418, %v1417
    %v1463 = vpack.c.b16 %v1420, %v1419
    %v1464 = vpack.c.b16 %v1422, %v1421
    %v1465 = vpack.c.b16 %v1424, %v1423
    %v1466 = vpack.c.b16 %v1426, %v1425
    %v1467 = vpack.c.b16 %v1428, %v1427
    %v1468 = vpack.c.b16 %v1430, %v1429
    %v1469 = vpack.c.b16 %v1432, %v1431
    %v1470 = vpack.c.b16 %v1434, %v1433
    %v1471 = vpack.c.b16 %v1436, %v1435
    %v1472 = vpack.c.b16 %v1438, %v1437
    %v1473 = vpack.c.b16 %v1440, %v1439
    %v1474 = vpack.c.b16 %v1442, %v1441
    %1507 = vmatprep.subr.bf16.mxu0 0
    %1508 = vmatpush1.bf16.msra.mxu0 %v1450
    %1509 = vmatprep.subr.bf16.mxu0 0
    %1510 = vmatpush1.bf16.msra.mxu0 %v1449
    %1511 = vmatprep.subr.bf16.mxu0 0
    %1512 = vmatpush1.bf16.msra.mxu0 %v1448
    %1513 = vmatprep.subr.bf16.mxu0 0
    %1514 = vmatpush1.bf16.msra.mxu0 %v1447
    %1515 = vmatprep.subr.bf16.mxu0 0
    %1516 = vmatpush1.bf16.msra.mxu0 %v1446
    %1517 = vmatprep.subr.bf16.mxu0 0
    %1518 = vmatpush1.bf16.msra.mxu0 %v1445
    %1519 = vmatprep.subr.bf16.mxu0 0
    %1520 = vmatpush1.bf16.msra.mxu0 %v1444
    %1521 = vmatprep.subr.bf16.mxu0 0
    %1522 = vmatpush1.bf16.msra.mxu0 %v1443
    %1523 = vmatprep.subr.bf16.mxu0 0
    %1524 = vmatpush2.bf16.msra.mxu0 %v1458
    %1525 = vmatprep.subr.bf16.mxu0 0
    %1526 = vmatpush2.bf16.msra.mxu0 %v1457
    %1527 = vmatprep.subr.bf16.mxu0 0
    %1528 = vmatpush2.bf16.msra.mxu0 %v1456
    %1529 = vmatprep.subr.bf16.mxu0 0
    %1530 = vmatpush2.bf16.msra.mxu0 %v1455
    %1531 = vmatprep.subr.bf16.mxu0 0
    %1532 = vmatpush2.bf16.msra.mxu0 %v1454
    %1533 = vmatprep.subr.bf16.mxu0 0
    %1534 = vmatpush2.bf16.msra.mxu0 %v1453
    %1535 = vmatprep.subr.bf16.mxu0 0
    %1536 = vmatpush2.bf16.msra.mxu0 %v1452
    %1537 = vmatprep.subr.bf16.mxu0 0
    %1538 = vmatpush2.bf16.msra.mxu0 %v1451
    %1539 = vmatprep.mubr.bf16.mxu0 %v1241
    %1540 = vmatmul.mubr.bf16.gmra.mxu0 %v1240
    %v1541 = vpop.f32.mrf.mxu0
    %v1542 = vadd.f32 %v1313, %v1541
    %v1543 = vpop.f32.mrf.mxu0
    %v1544 = vpop.f32.mrf.mxu0
    %v1545 = vpop.f32.mrf.mxu0
    %1546 = vdwg.mxu0
    %1547 = vmatprep.subr.bf16.mxu0 0
    %1548 = vmatpush1.bf16.msra.mxu0 %v1466
    %1549 = vmatprep.subr.bf16.mxu0 0
    %1550 = vmatpush1.bf16.msra.mxu0 %v1465
    %1551 = vmatprep.subr.bf16.mxu0 0
    %1552 = vmatpush1.bf16.msra.mxu0 %v1464
    %1553 = vmatprep.subr.bf16.mxu0 0
    %1554 = vmatpush1.bf16.msra.mxu0 %v1463
    %1555 = vmatprep.subr.bf16.mxu0 0
    %1556 = vmatpush1.bf16.msra.mxu0 %v1462
    %1557 = vmatprep.subr.bf16.mxu0 0
    %1558 = vmatpush1.bf16.msra.mxu0 %v1461
    %1559 = vmatprep.subr.bf16.mxu0 0
    %1560 = vmatpush1.bf16.msra.mxu0 %v1460
    %1561 = vmatprep.subr.bf16.mxu0 0
    %1562 = vmatpush1.bf16.msra.mxu0 %v1459
    %1563 = vmatprep.subr.bf16.mxu0 0
    %1564 = vmatpush2.bf16.msra.mxu0 %v1474
    %1565 = vmatprep.subr.bf16.mxu0 0
    %1566 = vmatpush2.bf16.msra.mxu0 %v1473
    %1567 = vmatprep.subr.bf16.mxu0 0
    %1568 = vmatpush2.bf16.msra.mxu0 %v1472
    %1569 = vmatprep.subr.bf16.mxu0 0
    %1570 = vmatpush2.bf16.msra.mxu0 %v1471
    %1571 = vmatprep.subr.bf16.mxu0 0
    %1572 = vmatpush2.bf16.msra.mxu0 %v1470
    %1573 = vmatprep.subr.bf16.mxu0 0
    %1574 = vmatpush2.bf16.msra.mxu0 %v1469
    %1575 = vmatprep.subr.bf16.mxu0 0
    %1576 = vmatpush2.bf16.msra.mxu0 %v1468
    %1577 = vmatprep.subr.bf16.mxu0 0
    %1578 = vmatpush2.bf16.msra.mxu0 %v1467
    %1579 = vmatprep.mubr.bf16.mxu0 %v1243
    %1580 = vmatmul.mubr.bf16.gmra.mxu0 %v1242
    %v1581 = vpop.f32.mrf.mxu0
    %v1582 = vadd.f32 %v1542, %v1581
    %v1583 = vpop.f32.mrf.mxu0
    %v1584 = vpop.f32.mrf.mxu0
    %v1585 = vpop.f32.mrf.mxu0
    %1586 = vdwg.mxu0
    %1587 = vst [vmem:[#allocation11] sm:$0xff] %v1582
    // Predicated region
    $region50: #{qnetwork_forward_padded.1} parent=1 // pred_check
      _
    $region51: #{qnetwork_forward_padded.1} parent=1 // pred_check_branch
      %1589 = sbr.rel (0) target = $region53
    $region52: #{qnetwork_forward_padded.1} parent=1 // pred_region
      %s1591 = ssub.s32 128, 128
      %1592 = vsyncadd [#allocation4], %s1591
      %s1594 = sshll.u32 [#allocation11], 4
      %s1595 = int_to_ptr.vmem [resolvable:$true] %s1594
      %1597 = dma.vmem_to_hbm [thread:$0]  %s1595, 128, %s7, [#allocation4]
    $region53: #{qnetwork_forward_padded.1} parent=1 // pred_fallthru
      _
    // Predicated region
    $region54: #{qnetwork_forward_padded.1} parent=1 // pred_check
      _
    $region55: #{qnetwork_forward_padded.1} parent=1 // pred_check_branch
      %1599 = sbr.rel (0) target = $region57
    $region56: #{qnetwork_forward_padded.1} parent=1 // pred_region
      %1600 = dma.done [#allocation4], 128
    $region57: #{qnetwork_forward_padded.1} parent=1 // pred_fallthru
      _
    %1601 = vsyncpa [#allocation3], 1
    %1602 = vsyncpa [#allocation6], 1
    %1603 = vsyncpa [#allocation9], 1
    %1604 = vsyncpa [#allocation4], 1

</llo_original>
